<compile_context>
chip_gen: v5e
topology: v5e:2x2
jax: 0.10.0
libtpu: 0.0.40
codegen_flags: <defaults>
</compile_context>

<pallas_src>
import jax
import jax.numpy as jnp
from jax.experimental import pallas as pl
from jax.experimental.pallas import tpu as pltpu


def _neg_loss_kernel(out_ref, tgt_ref, acc_ref):
    """Per (batch, split, tile) grid step: accumulate the negative focal loss.

    out_ref/tgt_ref: (R, 128) blocks of the flattened heatmaps (native dtype).
    acc_ref:         (8, 128) f32 lane-dense accumulator, resident across the
                     last (arbitrary) grid axis.
    """
    t = pl.program_id(2)

    @pl.when(t == 0)
    def _():
        acc_ref[...] = jnp.zeros_like(acc_ref)

    pred = out_ref[...].astype(jnp.float32)   # (R, 128)
    gt = tgt_ref[...].astype(jnp.float32)     # (R, 128)

    # NOTE: no clamping, matching the PyTorch module exactly; predictions are
    # assumed to lie strictly inside (0, 1) (sigmoid outputs).
    one_minus_gt = 1.0 - gt
    w2 = one_minus_gt * one_minus_gt                        # (1-gt)^2, VPU
    neg = jnp.log(1.0 - pred) * (pred * pred) * (w2 * w2)   # log -> EUP slot

    # VALU-only partial sums into the (8,128) accumulator; the cross-lane
    # reduce happens exactly once, in the wrapper.
    acc_ref[...] += jnp.sum(neg.reshape(-1, 8, 128), axis=0)


def _pick_tile(n_elems, itemsize, n_splits, max_block_bytes=2 << 20):
    """Choose (R, n_t): blocks of R rows x 128 lanes, n_t tiles per split.

    R is a multiple of the dtype's sublane pack and the block stays under
    ~2 MiB so double-buffered inputs fit every chip's default scoped VMEM.
    """
    sub = max(8, 32 // itemsize)                    # 8 f32 / 16 bf16 / 32 i8
    rows_total = pl.cdiv(n_elems, 128)
    rows_per_split = pl.cdiv(rows_total, n_splits)
    max_r = max(sub, ((max_block_bytes // (128 * itemsize)) // sub) * sub)
    n_t = pl.cdiv(rows_per_split, max_r)
    r = pl.cdiv(pl.cdiv(rows_per_split, n_t), sub) * sub    # minimal padding
    return r, n_t


def fast_focal_loss(out, target, ind, mask, cat):
    """JAX/Pallas equivalent of FastFocalLoss.forward.

    out, target: (B, C, H, W)  (out assumed strictly in (0, 1)); any float dtype.
    ind, cat:    (B, M) int
    mask:        (B, M) float
    """
    B, C, H, W = out.shape
    HW = H * W
    N = C * HW

    itemsize = max(jnp.dtype(out.dtype).itemsize,
                   jnp.dtype(target.dtype).itemsize)

    P = 2                                   # parallel splits (v7x dual-TC)
    R, n_t = _pick_tile(N, itemsize, P)
    padded_rows = P * n_t * R
    padded_N = padded_rows * 128

    # Free reshapes; pad only when needed.  Zero padding adds exactly 0 loss.
    out_flat = out.reshape(B, N)
    tgt_flat = target.reshape(B, N)
    if padded_N != N:
        pad = ((0, 0), (0, padded_N - N))
        out_flat = jnp.pad(out_flat, pad)
        tgt_flat = jnp.pad(tgt_flat, pad)
    out3 = out_flat.reshape(B, padded_rows, 128)
    tgt3 = tgt_flat.reshape(B, padded_rows, 128)

    neg_partials = pl.pallas_call(
        _neg_loss_kernel,
        out_shape=jax.ShapeDtypeStruct((B, P, 8, 128), jnp.float32),
        grid_spec=pltpu.PrefetchScalarGridSpec(
            num_scalar_prefetch=0,
            grid=(B, P, n_t),
            in_specs=[
                pl.BlockSpec((None, R, 128),
                             lambda b, p, t: (b, p * n_t + t, 0)),   # out
                pl.BlockSpec((None, R, 128),
                             lambda b, p, t: (b, p * n_t + t, 0)),   # target
            ],
            out_specs=pl.BlockSpec((None, None, 8, 128),
                                   lambda b, p, t: (b, p, 0, 0)),
        ),
        compiler_params=pltpu.CompilerParams(
            dimension_semantics=("parallel", "parallel", "arbitrary")),
    )(out3, tgt3)
    neg_loss = jnp.sum(neg_partials)

    # ---- positive loss: exact gather of B*M scalars, done with XLA ----
    feat_flat = out.reshape(B, C * HW)
    flat_idx = cat.astype(jnp.int32) * HW + ind.astype(jnp.int32)      # (B, M)
    pos_pred = jnp.take_along_axis(feat_flat, flat_idx, axis=1).astype(jnp.float32)
    mask_f = mask.astype(jnp.float32)
    pos_loss = jnp.sum(jnp.log(pos_pred) * jnp.square(1.0 - pos_pred) * mask_f)
    num_pos = jnp.sum(mask_f)

    denom = jnp.where(num_pos == 0, 1.0, num_pos)
    return jnp.where(num_pos == 0,
                     -neg_loss,
                     -(pos_loss + neg_loss) / denom)


def _reference(out, target, ind, mask, cat):
    # Pure-JAX reference (same math as the PyTorch module).
    B, C, H, W = out.shape
    HW = H * W
    outf = out.astype(jnp.float32)
    tgtf = target.astype(jnp.float32)
    neg = jnp.log(1.0 - outf) * outf ** 2 * (1.0 - tgtf) ** 4
    neg_loss = jnp.sum(neg)
    feat = outf.reshape(B, C, HW)                                      # (B,C,HW)
    gathered = jnp.take_along_axis(
        jnp.transpose(feat, (0, 2, 1)),                                # (B,HW,C)
        ind[:, :, None].astype(jnp.int32), axis=1)                     # (B,M,C)
    pos_pred = jnp.take_along_axis(
        gathered, cat[:, :, None].astype(jnp.int32), axis=2)[..., 0]
    pos_loss = jnp.sum(jnp.log(pos_pred) * (1.0 - pos_pred) ** 2
                       * mask.astype(jnp.float32))
    num_pos = jnp.sum(mask.astype(jnp.float32))
    return jnp.where(num_pos == 0,
                     -neg_loss,
                     -(pos_loss + neg_loss) / jnp.where(num_pos == 0, 1.0, num_pos))


if __name__ == "__main__":
    key = jax.random.PRNGKey(0)
    B, C, H, W, M = 2, 4, 16, 16, 8
    k1, k2, k3, k4, k5 = jax.random.split(key, 5)

    out = jax.nn.sigmoid(jax.random.normal(k1, (B, C, H, W), jnp.float32))
    target = jax.random.uniform(k2, (B, C, H, W), jnp.float32,
                                minval=0.0, maxval=0.999)
    ind = jax.random.randint(k3, (B, M), 0, H * W, jnp.int32)
    cat = jax.random.randint(k4, (B, M), 0, C, jnp.int32)
    mask = (jax.random.uniform(k5, (B, M)) > 0.3).astype(jnp.float32)

    loss = jax.block_until_ready(fast_focal_loss(out, target, ind, mask, cat))
    ref = jax.block_until_ready(_reference(out, target, ind, mask, cat))
    assert jnp.allclose(loss, ref, rtol=1e-5, atol=1e-5), (loss, ref)
    print("KERNEL_OK")
</pallas_src>

<mosaic_0001>
module attributes {stable_mosaic.version = 11 : i64} {
  func.func @_neg_loss_kernel(%arg0: i32, %arg1: i32, %arg2: i32, %arg3: memref<1x8x128xf32, #tpu.memory_space<vmem>>, %arg4: memref<1x8x128xf32, #tpu.memory_space<vmem>>, %arg5: memref<1x1x8x128xf32, #tpu.memory_space<vmem>>) attributes {dimension_semantics = [#tpu.dimension_semantics<parallel>, #tpu.dimension_semantics<parallel>, #tpu.dimension_semantics<arbitrary>], iteration_bounds = array<i64: 2, 2, 1>, scalar_prefetch = 0 : i64, scratch_operands = 0 : i64, tpu.core_type = #tpu.core_type<tc>, window_params = [{transform_indices = @transform_0, window_bounds = array<i64: 1, 8, 128>}, {transform_indices = @transform_1, window_bounds = array<i64: 1, 8, 128>}, {transform_indices = @transform_2, window_bounds = array<i64: 1, 1, 8, 128>}]} {
    %c0_i32 = arith.constant 0 : i32
    %0 = arith.cmpi eq, %arg2, %c0_i32 : i32
    %1 = arith.extui %0 : i1 to i32
    %c0_i32_0 = arith.constant 0 : i32
    %2 = arith.cmpi ne, %1, %c0_i32_0 : i32
    scf.if %2 {
      %cst_16 = arith.constant 0.000000e+00 : f32
      %25 = vector.broadcast %cst_16 : f32 to vector<8x128xf32>
      %c0_17 = arith.constant 0 : index
      %c0_18 = arith.constant 0 : index
      %c0_19 = arith.constant 0 : index
      %c0_20 = arith.constant 0 : index
      %26 = vector.load %arg5[%c0_17, %c0_18, %c0_19, %c0_20] : memref<1x1x8x128xf32, #tpu.memory_space<vmem>>, vector<1x1x8x128xf32>
      %27 = vector.shape_cast %26 : vector<1x1x8x128xf32> to vector<8x128xf32>
      %28 = vector.shape_cast %25 : vector<8x128xf32> to vector<1x1x8x128xf32>
      tpu.vector_store %arg5[%c0_17, %c0_18, %c0_19, %c0_20], %28 {strides = array<i32>} : memref<1x1x8x128xf32, #tpu.memory_space<vmem>>, vector<1x1x8x128xf32>,
    } else {
    }
    %c0 = arith.constant 0 : index
    %c0_1 = arith.constant 0 : index
    %c0_2 = arith.constant 0 : index
    %3 = vector.load %arg3[%c0, %c0_1, %c0_2] : memref<1x8x128xf32, #tpu.memory_space<vmem>>, vector<1x8x128xf32>
    %4 = vector.shape_cast %3 : vector<1x8x128xf32> to vector<8x128xf32>
    %c0_3 = arith.constant 0 : index
    %c0_4 = arith.constant 0 : index
    %c0_5 = arith.constant 0 : index
    %5 = vector.load %arg4[%c0_3, %c0_4, %c0_5] : memref<1x8x128xf32, #tpu.memory_space<vmem>>, vector<1x8x128xf32>
    %6 = vector.shape_cast %5 : vector<1x8x128xf32> to vector<8x128xf32>
    %cst = arith.constant 1.000000e+00 : f32
    %7 = vector.broadcast %cst : f32 to vector<8x128xf32>
    %8 = arith.subf %7, %6 : vector<8x128xf32>
    %9 = arith.mulf %8, %8 : vector<8x128xf32>
    %cst_6 = arith.constant 1.000000e+00 : f32
    %10 = vector.broadcast %cst_6 : f32 to vector<8x128xf32>
    %11 = arith.subf %10, %4 : vector<8x128xf32>
    %12 = math.log %11 : vector<8x128xf32>
    %13 = arith.mulf %4, %4 : vector<8x128xf32>
    %14 = arith.mulf %12, %13 : vector<8x128xf32>
    %15 = arith.mulf %9, %9 : vector<8x128xf32>
    %16 = arith.mulf %14, %15 : vector<8x128xf32>
    %c0_7 = arith.constant 0 : index
    %c0_8 = arith.constant 0 : index
    %c0_9 = arith.constant 0 : index
    %c0_10 = arith.constant 0 : index
    %17 = vector.load %arg5[%c0_7, %c0_8, %c0_9, %c0_10] : memref<1x1x8x128xf32, #tpu.memory_space<vmem>>, vector<1x1x8x128xf32>
    %18 = vector.shape_cast %17 : vector<1x1x8x128xf32> to vector<8x128xf32>
    %19 = vector.shape_cast %16 : vector<8x128xf32> to vector<1x8x128xf32>
    %cst_11 = arith.constant dense<0.000000e+00> : vector<8x128xf32>
    %20 = vector.multi_reduction <add>, %19, %cst_11 [0] : vector<1x8x128xf32> to vector<8x128xf32>
    %21 = arith.addf %18, %20 : vector<8x128xf32>
    %c0_12 = arith.constant 0 : index
    %c0_13 = arith.constant 0 : index
    %c0_14 = arith.constant 0 : index
    %c0_15 = arith.constant 0 : index
    %22 = vector.load %arg5[%c0_12, %c0_13, %c0_14, %c0_15] : memref<1x1x8x128xf32, #tpu.memory_space<vmem>>, vector<1x1x8x128xf32>
    %23 = vector.shape_cast %22 : vector<1x1x8x128xf32> to vector<8x128xf32>
    %24 = vector.shape_cast %21 : vector<8x128xf32> to vector<1x1x8x128xf32>
    tpu.vector_store %arg5[%c0_12, %c0_13, %c0_14, %c0_15], %24 {strides = array<i32>} : memref<1x1x8x128xf32, #tpu.memory_space<vmem>>, vector<1x1x8x128xf32>,
    return
  }
  func.func @transform_0(%arg0: i32, %arg1: i32, %arg2: i32) -> (i32, i32, i32) {
    %c1_i32 = arith.constant 1 : i32
    %0 = arith.muli %arg1, %c1_i32 : i32
    %1 = arith.addi %0, %arg2 : i32
    %c0_i32 = arith.constant 0 : i32
    %c0_i32_0 = arith.constant 0 : i32
    return %arg0, %1, %c0_i32 : i32, i32, i32
  }
  func.func @transform_1(%arg0: i32, %arg1: i32, %arg2: i32) -> (i32, i32, i32) {
    %c1_i32 = arith.constant 1 : i32
    %0 = arith.muli %arg1, %c1_i32 : i32
    %1 = arith.addi %0, %arg2 : i32
    %c0_i32 = arith.constant 0 : i32
    %c0_i32_0 = arith.constant 0 : i32
    return %arg0, %1, %c0_i32 : i32, i32, i32
  }
  func.func @transform_2(%arg0: i32, %arg1: i32, %arg2: i32) -> (i32, i32, i32, i32) {
    %c0_i32 = arith.constant 0 : i32
    %c0_i32_0 = arith.constant 0 : i32
    %c0_i32_1 = arith.constant 0 : i32
    return %arg0, %arg1, %c0_i32, %c0_i32_0 : i32, i32, i32, i32
  }
}

</mosaic_0001>

<llo_original>
// kernel: tpu_custom_call.1
$region0: #{tpu_custom_call.1}
  #allocation0 [shape = 'u32[]', space=smem, size = 0x4, offset = 0x4, fixed_abs, tag = 'smem constant byte address 0x4 - core index']
  #allocation1 [shape = 'u32[72,128]{1,0:T(1,128)}', space=vmem, size = 0x9000, scoped, tag = 'internal scratch']
  %s0 = inlined_call_operand.hbm [shape: f32[2,16,128], index: 0, kind: input, shape index: {}]
  %s1 = inlined_call_operand.hbm [shape: f32[2,16,128], index: 1, kind: input, shape index: {}]
  %s2 = inlined_call_operand.hbm [shape: f32[2,2,8,128], index: 2, kind: output, shape index: {}]
  %s3 = sld [smem:[#allocation0]]
  $region53: #{tpu_custom_call.1} parent=0
    _
  %s5 = ssub.s32 1, %s3
  %s6 = scalar_select 0, %s5, %s3
  $region1: #{tpu_custom_call.1} parent=0
    #allocation2 [shape = 'u8[8192]{0}', space=vmem, size = 0x2000, scoped, tag = 'input window, operand 0']
    #allocation3 [shape = 's32[2]{0}', space=sflag, size = 0x8, scoped, tag = 'scoped memory for tpu_custom_call.1']
    #allocation4 [shape = 's32[2]{0}', space=sflag, size = 0x8, scoped, tag = 'scoped memory for tpu_custom_call.1']
    #allocation5 [shape = 'u8[8192]{0}', space=vmem, size = 0x2000, scoped, tag = 'input window, operand 1']
    #allocation6 [shape = 's32[2]{0}', space=sflag, size = 0x8, scoped, tag = 'scoped memory for tpu_custom_call.1']
    #allocation7 [shape = 'u8[8192]{0}', space=vmem, size = 0x2000, scoped, tag = 'output window, operand 0']
    %7 = vsyncpa [#allocation3], 0
    %s8 = scalar_lea.sflag [#allocation3], 1
    %9 = vsyncpa %s8, 0
    %10 = vsyncpa [#allocation6], 0
    %s11 = scalar_lea.sflag [#allocation6], 1
    %12 = vsyncpa %s11, 0
    %13 = vsyncpa [#allocation4], 0
    %s14 = scalar_lea.sflag [#allocation4], 1
    %15 = vsyncpa %s14, 0
    loop: start=0, step=1, limit=6
    $region2: #{tpu_custom_call.1} parent=1 // loop_pre_header
      _
    $region3: #{tpu_custom_call.1} parent=1 // loop_header
      %s17 = sphi 0, %s21
      %p18 = scmp.ge.s32.totalorder %s17, 6
      %s24 = sphi 0, %s43
      %s25 = sphi 0, %s39
      %s26 = sphi 0, %s35
      %s27 = sphi 0, %s24
      %s28 = sphi 0, %s25
      %s29 = sphi 0, %s26
      %s30 = sphi 0, %s27
      %s31 = sphi 0, %s28
      %s32 = sphi 0, %s29
      %s50 = sphi 0, %s52
      %s53 = sphi 0, %s50
      %s54 = sphi 0, %s53
      %s70 = sphi 0, %s54
      %s80 = sphi 0, %s82
      %s83 = sphi 0, %s80
      %s84 = sphi 0, %s83
      %s100 = sphi 0, %s84
      %s108 = sphi 0, %s110
      %s111 = sphi 0, %s108
      %s112 = sphi 0, %s111
      %s128 = sphi 0, %s112
    $region4: #{tpu_custom_call.1} parent=1 // loop_header_branch
      %20 = sbr.rel (%p18) target = $region8
    $region5: #{tpu_custom_call.1} parent=1 // loop_body
      %s22 = ssub.s32 %s17, 1
      %s23 = ssub.s32 %s17, 2
      %s33 = sadd.s32 1, %s26
      %p34 = scmp.ge.s32.totalorder %s33, 1
      %s35 = scalar_select %p34, 0, %s33
      %s36 = sadd.s32 1, %s25
      %s37 = scalar_select %p34, %s36, %s25
      %p38 = scmp.ge.s32.totalorder %s37, 2
      %s39 = scalar_select %p38, 0, %s37
      %s40 = sadd.s32 1, %s24
      %s41 = scalar_select %p38, %s40, %s24
      %p42 = scmp.ge.s32.totalorder %s41, 2
      %s43 = scalar_select %p42, 0, %s41
      %s44 = sadd.s32 %s25, %s26
      %s45 = sadd.s32 %s39, %s35
      %s46 = ssub.s32 %s24, %s43
      %s47 = ssub.s32 %s44, %s45
      %s48 = sor.u32 %s46, %s47
      %p49 = scmp.eq.s32.totalorder %s48, 0
      %s51 = sadd.s32 %s50, 1
      %s52 = scalar_select %p49, %s50, %s51
      %p55 = pneg %p49
      %p56 = scmp.eq.s32.totalorder %s17, 3
      %p57 = por %p55, %p56
      %p58 = scmp.ne.s32.totalorder %s50, %s53
      %p59 = scmp.eq.s32.totalorder %s17, 0
      %p60 = por %p58, %p59
      %p61 = scmp.ne.s32.totalorder %s50, %s53
      %p62 = scmp.eq.s32.totalorder %s22, 3
      %p63 = por %p61, %p62
      %p64 = scmp.ne.s32.totalorder %s53, %s54
      %p65 = scmp.eq.s32.totalorder %s22, 0
      %p66 = por %p64, %p65
      %p67 = scmp.ne.s32.totalorder %s53, %s54
      %p68 = scmp.eq.s32.totalorder %s23, 3
      %p69 = por %p67, %p68
      %p71 = scmp.ne.s32.totalorder %s54, %s70
      %p72 = scmp.eq.s32.totalorder %s23, 0
      %p73 = por %p71, %p72
      %s74 = sadd.s32 %s25, %s26
      %s75 = sadd.s32 %s39, %s35
      %s76 = ssub.s32 %s24, %s43
      %s77 = ssub.s32 %s74, %s75
      %s78 = sor.u32 %s76, %s77
      %p79 = scmp.eq.s32.totalorder %s78, 0
      %s81 = sadd.s32 %s80, 1
      %s82 = scalar_select %p79, %s80, %s81
      %p85 = pneg %p79
      %p86 = scmp.eq.s32.totalorder %s17, 3
      %p87 = por %p85, %p86
      %p88 = scmp.ne.s32.totalorder %s80, %s83
      %p89 = scmp.eq.s32.totalorder %s17, 0
      %p90 = por %p88, %p89
      %p91 = scmp.ne.s32.totalorder %s80, %s83
      %p92 = scmp.eq.s32.totalorder %s22, 3
      %p93 = por %p91, %p92
      %p94 = scmp.ne.s32.totalorder %s83, %s84
      %p95 = scmp.eq.s32.totalorder %s22, 0
      %p96 = por %p94, %p95
      %p97 = scmp.ne.s32.totalorder %s83, %s84
      %p98 = scmp.eq.s32.totalorder %s23, 3
      %p99 = por %p97, %p98
      %p101 = scmp.ne.s32.totalorder %s84, %s100
      %p102 = scmp.eq.s32.totalorder %s23, 0
      %p103 = por %p101, %p102
      %s104 = ssub.s32 %s24, %s43
      %s105 = ssub.s32 %s25, %s39
      %s106 = sor.u32 %s104, %s105
      %p107 = scmp.eq.s32.totalorder %s106, 0
      %s109 = sadd.s32 %s108, 1
      %s110 = scalar_select %p107, %s108, %s109
      %p113 = pneg %p107
      %p114 = scmp.eq.s32.totalorder %s17, 3
      %p115 = por %p113, %p114
      %p116 = scmp.ne.s32.totalorder %s108, %s111
      %p117 = scmp.eq.s32.totalorder %s17, 0
      %p118 = por %p116, %p117
      %p119 = scmp.ne.s32.totalorder %s108, %s111
      %p120 = scmp.eq.s32.totalorder %s22, 3
      %p121 = por %p119, %p120
      %p122 = scmp.ne.s32.totalorder %s111, %s112
      %p123 = scmp.eq.s32.totalorder %s22, 0
      %p124 = por %p122, %p123
      %p125 = scmp.ne.s32.totalorder %s111, %s112
      %p126 = scmp.eq.s32.totalorder %s23, 3
      %p127 = por %p125, %p126
      %p129 = scmp.ne.s32.totalorder %s112, %s128
      %p130 = scmp.eq.s32.totalorder %s23, 0
      %p131 = por %p129, %p130
      %p132 = scmp.le.s32.totalorder 1, %s17
      %p133 = scmp.lt.s32.totalorder %s17, 5
      %p134 = pnand %p132, %p133
      %p135 = pneg %p134
      // Predicated region
      $region9: #{tpu_custom_call.1} parent=5 // pred_check
        _
      $region10: #{tpu_custom_call.1} parent=5 // pred_check_branch
        %137 = sbr.rel (%p134) target = $region12
      $region11: #{tpu_custom_call.1} parent=5 // pred_region
        %s138 = ssub.s32 %s17, 1
      $region12: #{tpu_custom_call.1} parent=5 // pred_fallthru
        _
      %p139 = scmp.lt.s32.totalorder %s17, 4
      // Predicated region
      $region13: #{tpu_custom_call.1} parent=5 // pred_check
        %p140 = pneg %p139
      $region14: #{tpu_custom_call.1} parent=5 // pred_check_branch
        %142 = sbr.rel (%p140) target = $region16
      $region15: #{tpu_custom_call.1} parent=5 // pred_region
        // Predicated region
        $region17: #{tpu_custom_call.1} parent=15 // pred_check
          %p143 = pneg %p60
        $region18: #{tpu_custom_call.1} parent=15 // pred_check_branch
          %145 = sbr.rel (%p143) target = $region20
        $region19: #{tpu_custom_call.1} parent=15 // pred_region
          %s146 = sand.u32 %s50, 1
          %s147 = scalar_lea.sflag [#allocation3], %s146
          %s148 = sand.u32 %s50, 1
          %s149 = smul.addr %s148, 8
          %s150 = scalar_lea.vmem [#allocation2], %s149
          %s151 = sadd.s32 %s25, %s26
          %153 = vsyncadd %s147, 0
          %s154 = smul.addr %s24, 2
          %s155 = sadd.s32 %s151, %s154
          %s156 = smul.addr %s155, 8
          %s157 = scalar_lea.hbm %s0, %s156
          %s159 = sshll.u32 %s157, 4
          %s160 = int_to_ptr.hbm [resolvable:$true] %s159
          %s161 = sshll.u32 %s150, 4
          %s162 = int_to_ptr.vmem [resolvable:$true] %s161
          %164 = dma.hbm_to_vmem [thread:$0]  %s160, 128, %s162, %s147
        $region20: #{tpu_custom_call.1} parent=15 // pred_fallthru
          _
        // Predicated region
        $region21: #{tpu_custom_call.1} parent=15 // pred_check
          %p165 = pneg %p90
        $region22: #{tpu_custom_call.1} parent=15 // pred_check_branch
          %167 = sbr.rel (%p165) target = $region24
        $region23: #{tpu_custom_call.1} parent=15 // pred_region
          %s168 = sand.u32 %s80, 1
          %s169 = scalar_lea.sflag [#allocation6], %s168
          %s170 = sand.u32 %s80, 1
          %s171 = smul.addr %s170, 8
          %s172 = scalar_lea.vmem [#allocation5], %s171
          %s173 = sadd.s32 %s25, %s26
          %175 = vsyncadd %s169, 0
          %s176 = smul.addr %s24, 2
          %s177 = sadd.s32 %s173, %s176
          %s178 = smul.addr %s177, 8
          %s179 = scalar_lea.hbm %s1, %s178
          %s181 = sshll.u32 %s179, 4
          %s182 = int_to_ptr.hbm [resolvable:$true] %s181
          %s183 = sshll.u32 %s172, 4
          %s184 = int_to_ptr.vmem [resolvable:$true] %s183
          %186 = dma.hbm_to_vmem [thread:$0]  %s182, 128, %s184, %s169
        $region24: #{tpu_custom_call.1} parent=15 // pred_fallthru
          _
      $region16: #{tpu_custom_call.1} parent=5 // pred_fallthru
        _
      %p187 = scmp.le.s32.totalorder 1, %s17
      %p188 = scmp.lt.s32.totalorder %s17, 5
      %p189 = pnand %p187, %p188
      %p190 = pneg %p189
      // Predicated region
      $region25: #{tpu_custom_call.1} parent=5 // pred_check
        _
      $region26: #{tpu_custom_call.1} parent=5 // pred_check_branch
        %192 = sbr.rel (%p189) target = $region28
      $region27: #{tpu_custom_call.1} parent=5 // pred_region
        %s193 = ssub.s32 %s17, 1
        %s194 = sand.u32 %s53, 1
        %s195 = scalar_lea.sflag [#allocation3], %s194
        %s196 = sand.u32 %s53, 1
        %s197 = smul.addr %s196, 8
        %s198 = scalar_lea.vmem [#allocation2], %s197
        // Predicated region
        $region29: #{tpu_custom_call.1} parent=27 // pred_check
          %p199 = pneg %p66
        $region30: #{tpu_custom_call.1} parent=27 // pred_check_branch
          %201 = sbr.rel (%p199) target = $region32
        $region31: #{tpu_custom_call.1} parent=27 // pred_region
          %203 = dma.done %s195, 128
        $region32: #{tpu_custom_call.1} parent=27 // pred_fallthru
          _
        %s204 = sand.u32 %s83, 1
        %s205 = scalar_lea.sflag [#allocation6], %s204
        %s206 = sand.u32 %s83, 1
        %s207 = smul.addr %s206, 8
        %s208 = scalar_lea.vmem [#allocation5], %s207
        // Predicated region
        $region33: #{tpu_custom_call.1} parent=27 // pred_check
          %p209 = pneg %p96
        $region34: #{tpu_custom_call.1} parent=27 // pred_check_branch
          %211 = sbr.rel (%p209) target = $region36
        $region35: #{tpu_custom_call.1} parent=27 // pred_region
          %213 = dma.done %s205, 128
        $region36: #{tpu_custom_call.1} parent=27 // pred_fallthru
          _
        %s214 = sand.u32 %s53, 1
        %s215 = scalar_lea.sflag [#allocation3], %s214
        %s216 = sand.u32 %s53, 1
        %s217 = smul.addr %s216, 8
        %s218 = scalar_lea.vmem [#allocation2], %s217
        %p219 = pneg %p66
        %p220 = pneg %p63
        %s221 = sand.u32 %s83, 1
        %s222 = scalar_lea.sflag [#allocation6], %s221
        %s223 = sand.u32 %s83, 1
        %s224 = smul.addr %s223, 8
        %s225 = scalar_lea.vmem [#allocation5], %s224
        %p226 = pneg %p96
        %p227 = pneg %p93
        %p228 = pneg %p124
        %p229 = pneg %p121
        %s230 = sand.u32 %s111, 1
        %s231 = scalar_lea.sflag [#allocation4], %s230
        %s232 = sand.u32 %s111, 1
        %s233 = smul.addr %s232, 8
        %s234 = scalar_lea.vmem [#allocation7], %s233
        %s235 = sadd.s32 %s28, %s29
        %s236 = sadd.s32 %s28, %s29
        %p237 = scmp.eq.s32.totalorder %s29, 0
        // Predicated region
        $region37: #{tpu_custom_call.1} parent=27 // pred_check
          %p238 = pneg %p237
        $region38: #{tpu_custom_call.1} parent=27 // pred_check_branch
          %240 = sbr.rel (%p238) target = $region40
        $region39: #{tpu_custom_call.1} parent=27 // pred_region
          %241 = vst [vmem:[%s234] sm:$0xff] 0.0
        $region40: #{tpu_custom_call.1} parent=27 // pred_fallthru
          _
        %v242 = vld [vmem:[%s198] sm:$0xff]
        %v243 = vld [vmem:[%s208] sm:$0xff]
        %v244 = vsub.f32 1.0, %v243
        %v245 = vmul.f32 %v244, %v244
        %v246 = vsub.f32 1.0, %v242
        %v247 = vlog2.pop %v246
        %v248 = vmul.f32 %v247, 0.6931472
        %v249 = vmul.f32 %v242, %v242
        %v250 = vmul.f32 %v248, %v249
        %v251 = vmul.f32 %v245, %v245
        %v252 = vmul.f32 %v250, %v251
        %v253 = vld [vmem:[%s234] sm:$0xff]
        %v254 = vadd.f32 %v252, 0.0
        %v255 = vadd.f32 %v253, %v254
        %256 = vst [vmem:[%s234] sm:$0xff] %v255
        %s257 = sand.u32 %s111, 1
        %s258 = scalar_lea.sflag [#allocation4], %s257
        %s259 = sand.u32 %s111, 1
        %s260 = smul.addr %s259, 8
        %s261 = scalar_lea.vmem [#allocation7], %s260
        // Predicated region
        $region41: #{tpu_custom_call.1} parent=27 // pred_check
          %p262 = pneg %p121
        $region42: #{tpu_custom_call.1} parent=27 // pred_check_branch
          %264 = sbr.rel (%p262) target = $region44
        $region43: #{tpu_custom_call.1} parent=27 // pred_region
          %266 = vsyncadd %s258, 0
          %s267 = smul.addr %s27, 2
          %s268 = sadd.s32 %s28, %s267
          %s269 = smul.addr %s268, 8
          %s270 = scalar_lea.hbm %s2, %s269
          %s272 = sshll.u32 %s261, 4
          %s273 = int_to_ptr.vmem [resolvable:$true] %s272
          %s274 = sshll.u32 %s270, 4
          %s275 = int_to_ptr.hbm [resolvable:$true] %s274
          %277 = dma.vmem_to_hbm [thread:$0]  %s273, 128, %s275, %s258
        $region44: #{tpu_custom_call.1} parent=27 // pred_fallthru
          _
      $region28: #{tpu_custom_call.1} parent=5 // pred_fallthru
        _
      %p278 = scmp.le.s32.totalorder 2, %s17
      // Predicated region
      $region45: #{tpu_custom_call.1} parent=5 // pred_check
        %p279 = pneg %p278
      $region46: #{tpu_custom_call.1} parent=5 // pred_check_branch
        %281 = sbr.rel (%p279) target = $region48
      $region47: #{tpu_custom_call.1} parent=5 // pred_region
        %s282 = ssub.s32 %s17, 2
        // Predicated region
        $region49: #{tpu_custom_call.1} parent=47 // pred_check
          %p283 = pneg %p127
        $region50: #{tpu_custom_call.1} parent=47 // pred_check_branch
          %285 = sbr.rel (%p283) target = $region52
        $region51: #{tpu_custom_call.1} parent=47 // pred_region
          %s286 = sand.u32 %s112, 1
          %s287 = scalar_lea.sflag [#allocation4], %s286
          %s288 = sand.u32 %s112, 1
          %s289 = smul.addr %s288, 8
          %s290 = scalar_lea.vmem [#allocation7], %s289
          %292 = dma.done %s287, 128
        $region52: #{tpu_custom_call.1} parent=47 // pred_fallthru
          _
      $region48: #{tpu_custom_call.1} parent=5 // pred_fallthru
        _
    $region6: #{tpu_custom_call.1} parent=1 // loop_footer
      %s21 = sadd.s32 1, %s17
    $region7: #{tpu_custom_call.1} parent=1 // loop_footer_branch
      %16 = sbr.rel target = $region3
    $region8: #{tpu_custom_call.1} parent=1 // loop_exit
      _
    %293 = vsyncpa [#allocation3], 1
    %s294 = scalar_lea.sflag [#allocation3], 1
    %295 = vsyncpa %s294, 1
    %296 = vsyncpa [#allocation6], 1
    %s297 = scalar_lea.sflag [#allocation6], 1
    %298 = vsyncpa %s297, 1
    %299 = vsyncpa [#allocation4], 1
    %s300 = scalar_lea.sflag [#allocation4], 1
    %301 = vsyncpa %s300, 1

</llo_original>
